<compile_context>
chip_gen: v7x
topology: tpu7x:2x2x1
jax: 0.10.0
libtpu: 0.0.40
codegen_flags: <defaults>
</compile_context>

<pallas_src>
import jax
import jax.numpy as jnp
from jax import lax
from jax.experimental import pallas as pl
from jax.experimental.pallas import tpu as pltpu

EPS = 1e-5

_ACTIVATIONS = {
    "relu": lambda v: jnp.maximum(v, 0.0),
    "gelu": jax.nn.gelu,
    "silu": jax.nn.silu,
    "tanh": jnp.tanh,
}


def _layernorm_c(h, gamma, beta):
    """LayerNorm over the channel axis (axis 0 of a (C, L) tile), eps=1e-5."""
    mu = jnp.mean(h, axis=0, keepdims=True)
    var = jnp.mean((h - mu) ** 2, axis=0, keepdims=True)
    return (h - mu) * lax.rsqrt(var + EPS) * gamma + beta


def _make_kernel(*, kernel_size, tile_l, halo_l, halo_r, seq_len,
                 act_name, matmul_dtype, has_down):
    K = kernel_size
    TL = tile_l
    H_L, H_R = halo_l, halo_r
    H = H_L + H_R
    has_halo = H > 0
    p2l = (K - 1) // 2
    p2r = (K - 1) - p2l
    W = TL + H              # width of the conv1 input window
    W1 = TL + p2l + p2r     # width of the conv1 output / conv2 input window
    L = seq_len
    act = _ACTIVATIONS[act_name]

    def mm(a, b):
        if matmul_dtype is not None:
            a = a.astype(matmul_dtype)
            b = b.astype(matmul_dtype)
        return jnp.dot(a, b, preferred_element_type=jnp.float32)

    def body(xc_ref, halo_ref, wd_ref,
             g1_ref, be1_ref, w1_ref, b1_ref,
             g2_ref, be2_ref, w2_ref, rb_ref,
             o_ref):
        j = pl.program_id(1)
        xc = xc_ref[...].astype(jnp.float32)                     # (Cin, TL)

        # conv1 input window, covering global columns [j*TL - H_L, j*TL+TL+H_R)
        parts = []
        if H_L > 0:
            parts.append(halo_ref[:, :H_L].astype(jnp.float32))
        parts.append(xc)
        if H_R > 0:
            parts.append(halo_ref[:, H_L:].astype(jnp.float32))
        window = jnp.concatenate(parts, axis=1) if len(parts) > 1 else xc

        # Global position of every window column: implements PyTorch's 'same'
        # zero padding at the sequence ends and masks the padded tail tile.
        pos = j * TL - H_L + lax.broadcasted_iota(jnp.int32, (1, W), 1)
        valid = jnp.logical_and(pos >= 0, pos < L)

        # ---- main path ------------------------------------------------------
        a1 = act(_layernorm_c(window, g1_ref[...], be1_ref[...]))
        a1 = jnp.where(valid, a1, 0.0)

        # conv1: K taps fused into a single (Cout, K*Cin) @ (K*Cin, W1) matmul
        a1_taps = jnp.concatenate([a1[:, k:k + W1] for k in range(K)], axis=0)
        y1 = mm(w1_ref[...], a1_taps) + b1_ref[...]              # (Cout, W1)

        a2 = act(_layernorm_c(y1, g2_ref[...], be2_ref[...]))
        pos1 = j * TL - p2l + lax.broadcasted_iota(jnp.int32, (1, W1), 1)
        a2 = jnp.where(jnp.logical_and(pos1 >= 0, pos1 < L), a2, 0.0)

        # conv2 + (folded down_b + conv2_b) + residual (1x1 conv or identity).
        a2_taps = jnp.concatenate([a2[:, k:k + TL] for k in range(K)], axis=0)
        res = mm(wd_ref[...], xc) if wd_ref is not None else xc  # (Cout, TL)
        out = mm(w2_ref[...], a2_taps) + (res + rb_ref[...])
        o_ref[...] = out.astype(o_ref.dtype)

    def kernel(*refs):
        refs = list(refs)
        xc_ref = refs.pop(0)
        halo_ref = refs.pop(0) if has_halo else None
        wd_ref = refs.pop(0) if has_down else None
        (g1_ref, be1_ref, w1_ref, b1_ref,
         g2_ref, be2_ref, w2_ref, rb_ref, o_ref) = refs
        body(xc_ref, halo_ref, wd_ref, g1_ref, be1_ref, w1_ref, b1_ref,
             g2_ref, be2_ref, w2_ref, rb_ref, o_ref)

    return kernel


def _build_halos(x, tile_l, n_tiles, halo_l, halo_r):
    """Per-tile halo columns, shape (N, n_tiles, C, halo_l + halo_r).

    halos[n, j, :, :halo_l] = x[n, :, j*TL - halo_l : j*TL]
    halos[n, j, :, halo_l:] = x[n, :, (j+1)*TL : (j+1)*TL + halo_r]
    Out-of-range columns contain zeros; the kernel masks them anyway.
    """
    N, C, L = x.shape
    TL = tile_l
    Lt = n_tiles * TL
    pieces = []
    if halo_l > 0:
        xl = jnp.pad(x, ((0, 0), (0, 0), (halo_l, Lt - L)))
        pieces.append(xl[:, :, :Lt].reshape(N, C, n_tiles, TL)[..., :halo_l])
    if halo_r > 0:
        xr = jnp.pad(x, ((0, 0), (0, 0), (0, Lt - L + halo_r)))
        z = xr[:, :, TL:]
        z = jnp.pad(z, ((0, 0), (0, 0), (0, Lt - z.shape[-1])))
        pieces.append(z.reshape(N, C, n_tiles, TL)[..., :halo_r])
    halos = jnp.concatenate(pieces, axis=-1) if len(pieces) > 1 else pieces[0]
    return jnp.transpose(halos, (0, 2, 1, 3))       # (N, n_tiles, C, H)


def residual_block(x, params, *, activation="relu", tile_l=None,
                   matmul_dtype=None):
    """x: (N, Cin, L) float32 in PyTorch Conv1d layout. Returns (N, Cout, L)."""
    N, Cin, L = x.shape
    conv1_w = params["conv1_w"]                     # (Cout, Cin, K)
    Cout, _, K = conv1_w.shape

    p1l = (K - 1) // 2
    p1r = (K - 1) - p1l
    H_L = 2 * p1l                                   # conv1 + conv2 left halo
    H_R = 2 * p1r
    H = H_L + H_R

    # ---- choose the L tile ---------------------------------------------------
    if tile_l is None:
        tile_l = L if L <= 512 else 512             # 512-col f32 tiles ~ roofline
    if tile_l >= L:
        tile_l, n_tiles = L, 1
    else:
        assert tile_l % 128 == 0, "tile_l must be a multiple of 128 (or >= L)"
        n_tiles = pl.cdiv(L, tile_l)
    assert tile_l >= max(H_L, H_R, 1), "tile_l too small for the conv halo"
    Lt = n_tiles * tile_l
    x_core = x if Lt == L else jnp.pad(x, ((0, 0), (0, 0), (0, Lt - L)))

    # ---- kernel-side parameter layout (C on sublanes, L on lanes) ------------
    f32 = jnp.float32
    w1 = jnp.transpose(conv1_w, (0, 2, 1)).reshape(Cout, K * Cin).astype(f32)
    w2 = jnp.transpose(params["conv2_w"], (0, 2, 1)).reshape(Cout, K * Cout).astype(f32)
    b1 = params["conv1_b"].astype(f32)[:, None]
    b2 = params["conv2_b"].astype(f32)[:, None]
    has_down = params.get("down_w") is not None
    if has_down:
        wd = params["down_w"][:, :, 0].astype(f32)
        rb = params["down_b"].astype(f32)[:, None] + b2   # folded residual bias
    else:                                            # in_ch == out_ch -> Identity
        assert Cin == Cout, "Identity downsample requires in_channels == out_channels"
        wd = None
        rb = b2
    g1 = params["norm1_w"].astype(f32)[:, None]
    be1 = params["norm1_b"].astype(f32)[:, None]
    g2 = params["norm2_w"].astype(f32)[:, None]
    be2 = params["norm2_b"].astype(f32)[:, None]

    kernel = _make_kernel(kernel_size=K, tile_l=tile_l, halo_l=H_L, halo_r=H_R,
                          seq_len=L, act_name=activation,
                          matmul_dtype=matmul_dtype, has_down=has_down)

    full = lambda a: pl.BlockSpec(a.shape, lambda n, j: (0,) * a.ndim)
    in_specs = [pl.BlockSpec((None, Cin, tile_l), lambda n, j: (n, 0, j))]
    inputs = [x_core]
    if H > 0:
        halos = _build_halos(x, tile_l, n_tiles, H_L, H_R)
        in_specs.append(pl.BlockSpec((None, None, Cin, H),
                                     lambda n, j: (n, j, 0, 0)))
        inputs.append(halos)
    # Grid-invariant parameters (tiny; loaded once since their block index is
    # constant across the grid).
    param_list = ([wd] if has_down else []) + [g1, be1, w1, b1, g2, be2, w2, rb]
    for arr in param_list:
        in_specs.append(full(arr))
        inputs.append(arr)

    out = pl.pallas_call(
        kernel,
        out_shape=jax.ShapeDtypeStruct((N, Cout, Lt), jnp.float32),
        grid_spec=pltpu.PrefetchScalarGridSpec(
            num_scalar_prefetch=0,
            grid=(N, n_tiles),
            in_specs=in_specs,
            out_specs=pl.BlockSpec((None, Cout, tile_l), lambda n, j: (n, 0, j)),
        ),
        compiler_params=pltpu.CompilerParams(
            # Both axes produce disjoint output tiles -> shardable across
            # TensorCores (matters on v7x's 2 TCs even when N is small).
            dimension_semantics=("parallel", "parallel"),
            # Sized for ~512-col f32 tiles; re-derive if tile_l is enlarged
            # (v7x has only 64 MiB physical VMEM).
            vmem_limit_bytes=32 * 1024 * 1024,
        ),
    )(*inputs)

    return out if Lt == L else out[:, :, :L]


# -----------------------------------------------------------------------------
# Pure-JAX reference mirroring the PyTorch module, for correctness checks.
# -----------------------------------------------------------------------------
def reference(x_ncl, p, activation="relu"):
    act = _ACTIVATIONS[activation]
    K = p["conv1_w"].shape[-1]
    p1l = (K - 1) // 2
    p1r = (K - 1) - p1l

    def conv1d(x, w_oik, b, pad):
        y = lax.conv_general_dilated(x, w_oik, window_strides=(1,),
                                     padding=[pad],
                                     dimension_numbers=("NCH", "OIH", "NCH"))
        return y + b[None, :, None]

    def ln_c(x, g, b):
        xt = jnp.transpose(x, (0, 2, 1))
        mu = jnp.mean(xt, axis=-1, keepdims=True)
        var = jnp.mean((xt - mu) ** 2, axis=-1, keepdims=True)
        xt = (xt - mu) / jnp.sqrt(var + EPS) * g + b
        return jnp.transpose(xt, (0, 2, 1))

    if p.get("down_w") is not None:
        res = conv1d(x_ncl, p["down_w"], p["down_b"], (0, 0))
    else:
        res = x_ncl
    h = act(ln_c(x_ncl, p["norm1_w"], p["norm1_b"]))
    h = conv1d(h, p["conv1_w"], p["conv1_b"], (p1l, p1r))
    h = act(ln_c(h, p["norm2_w"], p["norm2_b"]))
    h = conv1d(h, p["conv2_w"], p["conv2_b"], (p1l, p1r))
    return h + res


if __name__ == "__main__":
    def make_params(key, cin, cout, k, with_down):
        ks = jax.random.split(key, 10)
        s = 0.1
        p = {
            "conv1_w": s * jax.random.normal(ks[0], (cout, cin, k), jnp.float32),
            "conv1_b": s * jax.random.normal(ks[1], (cout,), jnp.float32),
            "conv2_w": s * jax.random.normal(ks[2], (cout, cout, k), jnp.float32),
            "conv2_b": s * jax.random.normal(ks[3], (cout,), jnp.float32),
            "norm1_w": 1.0 + s * jax.random.normal(ks[6], (cin,), jnp.float32),
            "norm1_b": s * jax.random.normal(ks[7], (cin,), jnp.float32),
            "norm2_w": 1.0 + s * jax.random.normal(ks[8], (cout,), jnp.float32),
            "norm2_b": s * jax.random.normal(ks[9], (cout,), jnp.float32),
        }
        if with_down:
            p["down_w"] = s * jax.random.normal(ks[4], (cout, cin, 1), jnp.float32)
            p["down_b"] = s * jax.random.normal(ks[5], (cout,), jnp.float32)
        else:
            p["down_w"] = None
            p["down_b"] = None
        return p

    key = jax.random.PRNGKey(0)
    kp, kp2, kx1, kx2, kx3 = jax.random.split(key, 5)

    # Case 1: small single-tile sequence (L = 16), Cin != Cout (1x1 downsample).
    N, Cin, Cout, K = 2, 4, 8, 3
    params = make_params(kp, Cin, Cout, K, with_down=True)
    x1 = jax.random.normal(kx1, (N, Cin, 16), jnp.float32)
    out1 = jax.block_until_ready(residual_block(x1, params))
    ref1 = jax.block_until_ready(reference(x1, params))
    assert out1.shape == ref1.shape, (out1.shape, ref1.shape)
    assert jnp.allclose(out1, ref1, atol=1e-4, rtol=1e-4), (
        float(jnp.max(jnp.abs(out1 - ref1))))

    # Case 2: multi-tile sequence (L = 320, tile_l = 128) — exercises the conv
    # halo across tile boundaries and the masked padded tail tile.
    x2 = jax.random.normal(kx2, (N, Cin, 320), jnp.float32)
    out2 = jax.block_until_ready(residual_block(x2, params, tile_l=128))
    ref2 = jax.block_until_ready(reference(x2, params))
    assert out2.shape == ref2.shape, (out2.shape, ref2.shape)
    assert jnp.allclose(out2, ref2, atol=1e-4, rtol=1e-4), (
        float(jnp.max(jnp.abs(out2 - ref2))))

    # Case 3: in_channels == out_channels -> Identity downsample (matmul skipped).
    params_id = make_params(kp2, Cout, Cout, K, with_down=False)
    x3 = jax.random.normal(kx3, (N, Cout, 16), jnp.float32)
    out3 = jax.block_until_ready(residual_block(x3, params_id))
    ref3 = jax.block_until_ready(reference(x3, params_id))
    assert out3.shape == ref3.shape, (out3.shape, ref3.shape)
    assert jnp.allclose(out3, ref3, atol=1e-4, rtol=1e-4), (
        float(jnp.max(jnp.abs(out3 - ref3))))

    print("KERNEL_OK")
</pallas_src>

<mosaic_0001>
module attributes {stable_mosaic.version = 11 : i64} {
  func.func @kernel(%arg0: i32, %arg1: i32, %arg2: memref<1x4x16xf32, #tpu.memory_space<vmem>>, %arg3: memref<1x1x4x4xf32, #tpu.memory_space<vmem>>, %arg4: memref<8x4xf32, #tpu.memory_space<vmem>>, %arg5: memref<4x1xf32, #tpu.memory_space<vmem>>, %arg6: memref<4x1xf32, #tpu.memory_space<vmem>>, %arg7: memref<8x12xf32, #tpu.memory_space<vmem>>, %arg8: memref<8x1xf32, #tpu.memory_space<vmem>>, %arg9: memref<8x1xf32, #tpu.memory_space<vmem>>, %arg10: memref<8x1xf32, #tpu.memory_space<vmem>>, %arg11: memref<8x24xf32, #tpu.memory_space<vmem>>, %arg12: memref<8x1xf32, #tpu.memory_space<vmem>>, %arg13: memref<1x8x16xf32, #tpu.memory_space<vmem>>) attributes {dimension_semantics = [#tpu.dimension_semantics<parallel>, #tpu.dimension_semantics<parallel>], iteration_bounds = array<i64: 2, 1>, scalar_prefetch = 0 : i64, scratch_operands = 0 : i64, tpu.core_type = #tpu.core_type<tc>, window_params = [{transform_indices = @transform_0, window_bounds = array<i64: 1, 4, 16>}, {transform_indices = @transform_1, window_bounds = array<i64: 1, 1, 4, 4>}, {pipeline_mode = #tpu.pipeline_mode<synchronous>, transform_indices = @transform_2, window_bounds = array<i64: 8, 4>}, {pipeline_mode = #tpu.pipeline_mode<synchronous>, transform_indices = @transform_3, window_bounds = array<i64: 4, 1>}, {pipeline_mode = #tpu.pipeline_mode<synchronous>, transform_indices = @transform_4, window_bounds = array<i64: 4, 1>}, {pipeline_mode = #tpu.pipeline_mode<synchronous>, transform_indices = @transform_5, window_bounds = array<i64: 8, 12>}, {pipeline_mode = #tpu.pipeline_mode<synchronous>, transform_indices = @transform_6, window_bounds = array<i64: 8, 1>}, {pipeline_mode = #tpu.pipeline_mode<synchronous>, transform_indices = @transform_7, window_bounds = array<i64: 8, 1>}, {pipeline_mode = #tpu.pipeline_mode<synchronous>, transform_indices = @transform_8, window_bounds = array<i64: 8, 1>}, {pipeline_mode = #tpu.pipeline_mode<synchronous>, transform_indices = @transform_9, window_bounds = array<i64: 8, 24>}, {pipeline_mode = #tpu.pipeline_mode<synchronous>, transform_indices = @transform_10, window_bounds = array<i64: 8, 1>}, {transform_indices = @transform_11, window_bounds = array<i64: 1, 8, 16>}]} {
    %c0 = arith.constant 0 : index
    %c0_0 = arith.constant 0 : index
    %c0_1 = arith.constant 0 : index
    %0 = vector.load %arg2[%c0, %c0_0, %c0_1] : memref<1x4x16xf32, #tpu.memory_space<vmem>>, vector<1x4x16xf32>
    %1 = vector.shape_cast %0 : vector<1x4x16xf32> to vector<4x16xf32>
    %c0_2 = arith.constant 0 : index
    %c0_3 = arith.constant 0 : index
    %c0_4 = arith.constant 0 : index
    %c0_5 = arith.constant 0 : index
    %2 = vector.load %arg3[%c0_2, %c0_3, %c0_4, %c0_5] : memref<1x1x4x4xf32, #tpu.memory_space<vmem>>, vector<1x1x4x2xf32>
    %3 = vector.shape_cast %2 : vector<1x1x4x2xf32> to vector<4x2xf32>
    %c0_6 = arith.constant 0 : index
    %c0_7 = arith.constant 0 : index
    %c0_8 = arith.constant 0 : index
    %c2 = arith.constant 2 : index
    %4 = vector.load %arg3[%c0_6, %c0_7, %c0_8, %c2] : memref<1x1x4x4xf32, #tpu.memory_space<vmem>>, vector<1x1x4x2xf32>
    %5 = vector.shape_cast %4 : vector<1x1x4x2xf32> to vector<4x2xf32>
    %6 = tpu.concatenate %3, %1, %5 in 1 : vector<4x2xf32>, vector<4x16xf32>, vector<4x2xf32> -> vector<4x20xf32>
    %c16_i32 = arith.constant 16 : i32
    %7 = arith.muli %arg1, %c16_i32 : i32
    %c2_i32 = arith.constant 2 : i32
    %8 = arith.subi %7, %c2_i32 : i32
    %9 = tpu.iota {dimensions = array<i32: 1>} : vector<1x20xi32>
    %10 = vector.broadcast %8 : i32 to vector<1x20xi32>
    %11 = arith.addi %10, %9 : vector<1x20xi32>
    %c0_i32 = arith.constant 0 : i32
    %12 = vector.broadcast %c0_i32 : i32 to vector<1x20xi32>
    %13 = arith.cmpi sge, %11, %12 : vector<1x20xi32>
    %c16_i32_9 = arith.constant 16 : i32
    %14 = vector.broadcast %c16_i32_9 : i32 to vector<1x20xi32>
    %15 = arith.cmpi slt, %11, %14 : vector<1x20xi32>
    %16 = arith.andi %13, %15 : vector<1x20xi1>
    %c0_10 = arith.constant 0 : index
    %c0_11 = arith.constant 0 : index
    %17 = vector.load %arg5[%c0_10, %c0_11] : memref<4x1xf32, #tpu.memory_space<vmem>>, vector<4x1xf32>
    %c0_12 = arith.constant 0 : index
    %c0_13 = arith.constant 0 : index
    %18 = vector.load %arg6[%c0_12, %c0_13] : memref<4x1xf32, #tpu.memory_space<vmem>>, vector<4x1xf32>
    %cst = arith.constant dense<0.000000e+00> : vector<20xf32>
    %19 = vector.multi_reduction <add>, %6, %cst [0] : vector<4x20xf32> to vector<20xf32>
    %20 = vector.shape_cast %19 : vector<20xf32> to vector<1x20xf32>
    %cst_14 = arith.constant 4.000000e+00 : f32
    %21 = vector.broadcast %cst_14 : f32 to vector<1x20xf32>
    %22 = arith.divf %20, %21 : vector<1x20xf32>
    %23 = vector.broadcast %22 : vector<1x20xf32> to vector<4x20xf32>
    %24 = arith.subf %6, %23 : vector<4x20xf32>
    %25 = arith.mulf %24, %24 : vector<4x20xf32>
    %cst_15 = arith.constant dense<0.000000e+00> : vector<20xf32>
    %26 = vector.multi_reduction <add>, %25, %cst_15 [0] : vector<4x20xf32> to vector<20xf32>
    %27 = vector.shape_cast %26 : vector<20xf32> to vector<1x20xf32>
    %cst_16 = arith.constant 4.000000e+00 : f32
    %28 = vector.broadcast %cst_16 : f32 to vector<1x20xf32>
    %29 = arith.divf %27, %28 : vector<1x20xf32>
    %30 = vector.broadcast %22 : vector<1x20xf32> to vector<4x20xf32>
    %31 = arith.subf %6, %30 : vector<4x20xf32>
    %cst_17 = arith.constant 9.99999974E-6 : f32
    %32 = vector.broadcast %cst_17 : f32 to vector<1x20xf32>
    %33 = arith.addf %29, %32 : vector<1x20xf32>
    %34 = math.rsqrt %33 : vector<1x20xf32>
    %35 = vector.broadcast %34 : vector<1x20xf32> to vector<4x20xf32>
    %36 = arith.mulf %31, %35 : vector<4x20xf32>
    %37 = vector.broadcast %17 : vector<4x1xf32> to vector<4x20xf32>
    %38 = arith.mulf %36, %37 : vector<4x20xf32>
    %39 = vector.broadcast %18 : vector<4x1xf32> to vector<4x20xf32>
    %40 = arith.addf %38, %39 : vector<4x20xf32>
    %cst_18 = arith.constant 0.000000e+00 : f32
    %41 = vector.broadcast %cst_18 : f32 to vector<4x20xf32>
    %42 = arith.maximumf %40, %41 : vector<4x20xf32>
    %cst_19 = arith.constant 0.000000e+00 : f32
    %43 = vector.shape_cast %16 : vector<1x20xi1> to vector<1x20xi1>
    %44 = vector.broadcast %43 : vector<1x20xi1> to vector<4x20xi1>
    %45 = vector.broadcast %cst_19 : f32 to vector<4x20xf32>
    %46 = arith.select %44, %42, %45 : vector<4x20xi1>, vector<4x20xf32>
    %47 = vector.extract_strided_slice %46 {offsets = [0, 0], sizes = [4, 18], strides = [1, 1]} : vector<4x20xf32> to vector<4x18xf32>
    %48 = vector.extract_strided_slice %46 {offsets = [0, 1], sizes = [4, 18], strides = [1, 1]} : vector<4x20xf32> to vector<4x18xf32>
    %49 = vector.extract_strided_slice %46 {offsets = [0, 2], sizes = [4, 18], strides = [1, 1]} : vector<4x20xf32> to vector<4x18xf32>
    %50 = tpu.concatenate %47, %48, %49 in 0 : vector<4x18xf32>, vector<4x18xf32>, vector<4x18xf32> -> vector<12x18xf32>
    %c0_20 = arith.constant 0 : index
    %c0_21 = arith.constant 0 : index
    %51 = vector.load %arg7[%c0_20, %c0_21] : memref<8x12xf32, #tpu.memory_space<vmem>>, vector<8x12xf32>
    %cst_22 = arith.constant dense<0.000000e+00> : vector<8x18xf32>
    %52 = tpu.matmul %51, %50, %cst_22 {dimension_numbers = #tpu.dot_dimension_numbers<[1], [0], [0], [1], [0, 0, 1, 1], [], []>} : vector<8x12xf32>, vector<12x18xf32>, vector<8x18xf32> -> vector<8x18xf32>
    %c0_23 = arith.constant 0 : index
    %c0_24 = arith.constant 0 : index
    %53 = vector.load %arg8[%c0_23, %c0_24] : memref<8x1xf32, #tpu.memory_space<vmem>>, vector<8x1xf32>
    %54 = vector.broadcast %53 : vector<8x1xf32> to vector<8x18xf32>
    %55 = arith.addf %52, %54 : vector<8x18xf32>
    %c0_25 = arith.constant 0 : index
    %c0_26 = arith.constant 0 : index
    %56 = vector.load %arg9[%c0_25, %c0_26] : memref<8x1xf32, #tpu.memory_space<vmem>>, vector<8x1xf32>
    %c0_27 = arith.constant 0 : index
    %c0_28 = arith.constant 0 : index
    %57 = vector.load %arg10[%c0_27, %c0_28] : memref<8x1xf32, #tpu.memory_space<vmem>>, vector<8x1xf32>
    %cst_29 = arith.constant dense<0.000000e+00> : vector<18xf32>
    %58 = vector.multi_reduction <add>, %55, %cst_29 [0] : vector<8x18xf32> to vector<18xf32>
    %59 = vector.shape_cast %58 : vector<18xf32> to vector<1x18xf32>
    %cst_30 = arith.constant 8.000000e+00 : f32
    %60 = vector.broadcast %cst_30 : f32 to vector<1x18xf32>
    %61 = arith.divf %59, %60 : vector<1x18xf32>
    %62 = vector.broadcast %61 : vector<1x18xf32> to vector<8x18xf32>
    %63 = arith.subf %55, %62 : vector<8x18xf32>
    %64 = arith.mulf %63, %63 : vector<8x18xf32>
    %cst_31 = arith.constant dense<0.000000e+00> : vector<18xf32>
    %65 = vector.multi_reduction <add>, %64, %cst_31 [0] : vector<8x18xf32> to vector<18xf32>
    %66 = vector.shape_cast %65 : vector<18xf32> to vector<1x18xf32>
    %cst_32 = arith.constant 8.000000e+00 : f32
    %67 = vector.broadcast %cst_32 : f32 to vector<1x18xf32>
    %68 = arith.divf %66, %67 : vector<1x18xf32>
    %69 = vector.broadcast %61 : vector<1x18xf32> to vector<8x18xf32>
    %70 = arith.subf %55, %69 : vector<8x18xf32>
    %cst_33 = arith.constant 9.99999974E-6 : f32
    %71 = vector.broadcast %cst_33 : f32 to vector<1x18xf32>
    %72 = arith.addf %68, %71 : vector<1x18xf32>
    %73 = math.rsqrt %72 : vector<1x18xf32>
    %74 = vector.broadcast %73 : vector<1x18xf32> to vector<8x18xf32>
    %75 = arith.mulf %70, %74 : vector<8x18xf32>
    %76 = vector.broadcast %56 : vector<8x1xf32> to vector<8x18xf32>
    %77 = arith.mulf %75, %76 : vector<8x18xf32>
    %78 = vector.broadcast %57 : vector<8x1xf32> to vector<8x18xf32>
    %79 = arith.addf %77, %78 : vector<8x18xf32>
    %cst_34 = arith.constant 0.000000e+00 : f32
    %80 = vector.broadcast %cst_34 : f32 to vector<8x18xf32>
    %81 = arith.maximumf %79, %80 : vector<8x18xf32>
    %c16_i32_35 = arith.constant 16 : i32
    %82 = arith.muli %arg1, %c16_i32_35 : i32
    %c1_i32 = arith.constant 1 : i32
    %83 = arith.subi %82, %c1_i32 : i32
    %84 = tpu.iota {dimensions = array<i32: 1>} : vector<1x18xi32>
    %85 = vector.broadcast %83 : i32 to vector<1x18xi32>
    %86 = arith.addi %85, %84 : vector<1x18xi32>
    %c0_i32_36 = arith.constant 0 : i32
    %87 = vector.broadcast %c0_i32_36 : i32 to vector<1x18xi32>
    %88 = arith.cmpi sge, %86, %87 : vector<1x18xi32>
    %c16_i32_37 = arith.constant 16 : i32
    %89 = vector.broadcast %c16_i32_37 : i32 to vector<1x18xi32>
    %90 = arith.cmpi slt, %86, %89 : vector<1x18xi32>
    %91 = arith.andi %88, %90 : vector<1x18xi1>
    %cst_38 = arith.constant 0.000000e+00 : f32
    %92 = vector.shape_cast %91 : vector<1x18xi1> to vector<1x18xi1>
    %93 = vector.broadcast %92 : vector<1x18xi1> to vector<8x18xi1>
    %94 = vector.broadcast %cst_38 : f32 to vector<8x18xf32>
    %95 = arith.select %93, %81, %94 : vector<8x18xi1>, vector<8x18xf32>
    %96 = vector.extract_strided_slice %95 {offsets = [0, 0], sizes = [8, 16], strides = [1, 1]} : vector<8x18xf32> to vector<8x16xf32>
    %97 = vector.extract_strided_slice %95 {offsets = [0, 1], sizes = [8, 16], strides = [1, 1]} : vector<8x18xf32> to vector<8x16xf32>
    %98 = vector.extract_strided_slice %95 {offsets = [0, 2], sizes = [8, 16], strides = [1, 1]} : vector<8x18xf32> to vector<8x16xf32>
    %99 = tpu.concatenate %96, %97, %98 in 0 : vector<8x16xf32>, vector<8x16xf32>, vector<8x16xf32> -> vector<24x16xf32>
    %c0_39 = arith.constant 0 : index
    %c0_40 = arith.constant 0 : index
    %100 = vector.load %arg4[%c0_39, %c0_40] : memref<8x4xf32, #tpu.memory_space<vmem>>, vector<8x4xf32>
    %cst_41 = arith.constant dense<0.000000e+00> : vector<8x16xf32>
    %101 = tpu.matmul %100, %1, %cst_41 {dimension_numbers = #tpu.dot_dimension_numbers<[1], [0], [0], [1], [0, 0, 1, 1], [], []>} : vector<8x4xf32>, vector<4x16xf32>, vector<8x16xf32> -> vector<8x16xf32>
    %c0_42 = arith.constant 0 : index
    %c0_43 = arith.constant 0 : index
    %102 = vector.load %arg11[%c0_42, %c0_43] : memref<8x24xf32, #tpu.memory_space<vmem>>, vector<8x24xf32>
    %cst_44 = arith.constant dense<0.000000e+00> : vector<8x16xf32>
    %103 = tpu.matmul %102, %99, %cst_44 {dimension_numbers = #tpu.dot_dimension_numbers<[1], [0], [0], [1], [0, 0, 1, 1], [], []>} : vector<8x24xf32>, vector<24x16xf32>, vector<8x16xf32> -> vector<8x16xf32>
    %c0_45 = arith.constant 0 : index
    %c0_46 = arith.constant 0 : index
    %104 = vector.load %arg12[%c0_45, %c0_46] : memref<8x1xf32, #tpu.memory_space<vmem>>, vector<8x1xf32>
    %105 = vector.broadcast %104 : vector<8x1xf32> to vector<8x16xf32>
    %106 = arith.addf %101, %105 : vector<8x16xf32>
    %107 = arith.addf %103, %106 : vector<8x16xf32>
    %c0_47 = arith.constant 0 : index
    %c0_48 = arith.constant 0 : index
    %c0_49 = arith.constant 0 : index
    %108 = vector.load %arg13[%c0_47, %c0_48, %c0_49] : memref<1x8x16xf32, #tpu.memory_space<vmem>>, vector<1x8x16xf32>
    %109 = vector.shape_cast %108 : vector<1x8x16xf32> to vector<8x16xf32>
    %110 = vector.shape_cast %107 : vector<8x16xf32> to vector<1x8x16xf32>
    tpu.vector_store %arg13[%c0_47, %c0_48, %c0_49], %110 {strides = array<i32>} : memref<1x8x16xf32, #tpu.memory_space<vmem>>, vector<1x8x16xf32>,
    return
  }
  func.func @transform_0(%arg0: i32, %arg1: i32) -> (i32, i32, i32) {
    %c0_i32 = arith.constant 0 : i32
    %c0_i32_0 = arith.constant 0 : i32
    return %arg0, %c0_i32, %arg1 : i32, i32, i32
  }
  func.func @transform_1(%arg0: i32, %arg1: i32) -> (i32, i32, i32, i32) {
    %c0_i32 = arith.constant 0 : i32
    %c0_i32_0 = arith.constant 0 : i32
    %c0_i32_1 = arith.constant 0 : i32
    return %arg0, %arg1, %c0_i32, %c0_i32_0 : i32, i32, i32, i32
  }
  func.func @transform_2(%arg0: i32, %arg1: i32) -> (i32, i32) {
    %c0_i32 = arith.constant 0 : i32
    %c0_i32_0 = arith.constant 0 : i32
    %c0_i32_1 = arith.constant 0 : i32
    return %c0_i32, %c0_i32_0 : i32, i32
  }
  func.func @transform_3(%arg0: i32, %arg1: i32) -> (i32, i32) {
    %c0_i32 = arith.constant 0 : i32
    %c0_i32_0 = arith.constant 0 : i32
    %c0_i32_1 = arith.constant 0 : i32
    return %c0_i32, %c0_i32_0 : i32, i32
  }
  func.func @transform_4(%arg0: i32, %arg1: i32) -> (i32, i32) {
    %c0_i32 = arith.constant 0 : i32
    %c0_i32_0 = arith.constant 0 : i32
    %c0_i32_1 = arith.constant 0 : i32
    return %c0_i32, %c0_i32_0 : i32, i32
  }
  func.func @transform_5(%arg0: i32, %arg1: i32) -> (i32, i32) {
    %c0_i32 = arith.constant 0 : i32
    %c0_i32_0 = arith.constant 0 : i32
    %c0_i32_1 = arith.constant 0 : i32
    return %c0_i32, %c0_i32_0 : i32, i32
  }
  func.func @transform_6(%arg0: i32, %arg1: i32) -> (i32, i32) {
    %c0_i32 = arith.constant 0 : i32
    %c0_i32_0 = arith.constant 0 : i32
    %c0_i32_1 = arith.constant 0 : i32
    return %c0_i32, %c0_i32_0 : i32, i32
  }
  func.func @transform_7(%arg0: i32, %arg1: i32) -> (i32, i32) {
    %c0_i32 = arith.constant 0 : i32
    %c0_i32_0 = arith.constant 0 : i32
    %c0_i32_1 = arith.constant 0 : i32
    return %c0_i32, %c0_i32_0 : i32, i32
  }
  func.func @transform_8(%arg0: i32, %arg1: i32) -> (i32, i32) {
    %c0_i32 = arith.constant 0 : i32
    %c0_i32_0 = arith.constant 0 : i32
    %c0_i32_1 = arith.constant 0 : i32
    return %c0_i32, %c0_i32_0 : i32, i32
  }
  func.func @transform_9(%arg0: i32, %arg1: i32) -> (i32, i32) {
    %c0_i32 = arith.constant 0 : i32
    %c0_i32_0 = arith.constant 0 : i32
    %c0_i32_1 = arith.constant 0 : i32
    return %c0_i32, %c0_i32_0 : i32, i32
  }
  func.func @transform_10(%arg0: i32, %arg1: i32) -> (i32, i32) {
    %c0_i32 = arith.constant 0 : i32
    %c0_i32_0 = arith.constant 0 : i32
    %c0_i32_1 = arith.constant 0 : i32
    return %c0_i32, %c0_i32_0 : i32, i32
  }
  func.func @transform_11(%arg0: i32, %arg1: i32) -> (i32, i32, i32) {
    %c0_i32 = arith.constant 0 : i32
    %c0_i32_0 = arith.constant 0 : i32
    return %arg0, %c0_i32, %arg1 : i32, i32, i32
  }
}

</mosaic_0001>

<llo_original>
// kernel: tpu_custom_call.1
$region0: #{tpu_custom_call.1}
  #allocation0 [shape = 'u32[]', space=smem, size = 0x4, offset = 0x4, fixed_abs, tag = 'smem constant byte address 0x4 - core index']
  #allocation1 [shape = 'u32[144,128]{1,0:T(1,128)}', space=vmem, size = 0x12000, scoped, tag = 'internal scratch']
  %s0 = inlined_call_operand.vmem [shape: f32[2,4,16], index: 0, kind: input, shape index: {}]
  %s1 = inlined_call_operand.vmem [shape: f32[2,1,4,4], index: 1, kind: input, shape index: {}]
  %s2 = inlined_call_operand.vmem [shape: f32[8,4], index: 2, kind: input, shape index: {}]
  %s3 = inlined_call_operand.vmem [shape: f32[4,1], index: 3, kind: input, shape index: {}]
  %s4 = inlined_call_operand.vmem [shape: f32[4,1], index: 4, kind: input, shape index: {}]
  %s5 = inlined_call_operand.vmem [shape: f32[8,12], index: 5, kind: input, shape index: {}]
  %s6 = inlined_call_operand.vmem [shape: f32[8,1], index: 6, kind: input, shape index: {}]
  %s7 = inlined_call_operand.vmem [shape: f32[8,1], index: 7, kind: input, shape index: {}]
  %s8 = inlined_call_operand.vmem [shape: f32[8,1], index: 8, kind: input, shape index: {}]
  %s9 = inlined_call_operand.vmem [shape: f32[8,24], index: 9, kind: input, shape index: {}]
  %s10 = inlined_call_operand.vmem [shape: f32[8,1], index: 10, kind: input, shape index: {}]
  %s11 = inlined_call_operand.hbm [shape: f32[2,8,16], index: 11, kind: output, shape index: {}]
  %s12 = sld [smem:[#allocation0]]
  $region77: #{tpu_custom_call.1} parent=0
    _
  %s14 = ssub.s32 1, %s12
  %s15 = scalar_select 0, %s14, %s12
  $region1: #{tpu_custom_call.1} parent=0
    #allocation2 [shape = 'u8[8192]{0}', space=vmem, size = 0x2000, scoped, tag = 'output window, operand 0']
    #allocation3 [shape = 's32[2]{0}', space=sflag, size = 0x8, scoped, tag = 'scoped memory for tpu_custom_call.1']
    %16 = vsyncpa [#allocation3], 0
    %s17 = scalar_lea.sflag [#allocation3], 1
    %18 = vsyncpa %s17, 0
    loop: start=0, step=1, limit=4
    $region2: #{tpu_custom_call.1} parent=1 // loop_pre_header
      _
    $region3: #{tpu_custom_call.1} parent=1 // loop_header
      %s20 = sphi 0, %s24
      %p21 = scmp.ge.s32.totalorder %s20, 4
      %s27 = sphi 0, %s39
      %s28 = sphi 0, %s35
      %s29 = sphi 0, %s27
      %s30 = sphi 0, %s28
      %s31 = sphi 0, %s29
      %s32 = sphi 0, %s30
      %s44 = sphi 0, %s46
      %s47 = sphi 0, %s44
      %s48 = sphi 0, %s47
      %s64 = sphi 0, %s48
      %s72 = sphi 0, %s74
      %s75 = sphi 0, %s72
      %s76 = sphi 0, %s75
      %s92 = sphi 0, %s76
      %s96 = sphi 0, %s96
      %s98 = sphi 0, %s96
      %s99 = sphi 0, %s98
      %s113 = sphi 0, %s99
      %s117 = sphi 0, %s117
      %s119 = sphi 0, %s117
      %s120 = sphi 0, %s119
      %s134 = sphi 0, %s120
      %s138 = sphi 0, %s138
      %s140 = sphi 0, %s138
      %s141 = sphi 0, %s140
      %s155 = sphi 0, %s141
      %s159 = sphi 0, %s159
      %s161 = sphi 0, %s159
      %s162 = sphi 0, %s161
      %s176 = sphi 0, %s162
      %s180 = sphi 0, %s180
      %s182 = sphi 0, %s180
      %s183 = sphi 0, %s182
      %s197 = sphi 0, %s183
      %s201 = sphi 0, %s201
      %s203 = sphi 0, %s201
      %s204 = sphi 0, %s203
      %s218 = sphi 0, %s204
      %s222 = sphi 0, %s222
      %s224 = sphi 0, %s222
      %s225 = sphi 0, %s224
      %s239 = sphi 0, %s225
      %s243 = sphi 0, %s243
      %s245 = sphi 0, %s243
      %s246 = sphi 0, %s245
      %s260 = sphi 0, %s246
      %s264 = sphi 0, %s264
      %s266 = sphi 0, %s264
      %s267 = sphi 0, %s266
      %s281 = sphi 0, %s267
      %s289 = sphi 0, %s291
      %s292 = sphi 0, %s289
      %s293 = sphi 0, %s292
      %s309 = sphi 0, %s293
    $region4: #{tpu_custom_call.1} parent=1 // loop_header_branch
      %23 = sbr.rel (%p21) target = $region8
    $region5: #{tpu_custom_call.1} parent=1 // loop_body
      %s25 = ssub.s32 %s20, 1
      %s26 = ssub.s32 %s20, 2
      %s33 = sadd.s32 1, %s28
      %p34 = scmp.ge.s32.totalorder %s33, 1
      %s35 = scalar_select %p34, 0, %s33
      %s36 = sadd.s32 1, %s27
      %s37 = scalar_select %p34, %s36, %s27
      %p38 = scmp.ge.s32.totalorder %s37, 2
      %s39 = scalar_select %p38, 0, %s37
      %s40 = ssub.s32 %s27, %s39
      %s41 = ssub.s32 %s28, %s35
      %s42 = sor.u32 %s40, %s41
      %p43 = scmp.eq.s32.totalorder %s42, 0
      %s45 = sadd.s32 %s44, 1
      %s46 = scalar_select %p43, %s44, %s45
      %p49 = pneg %p43
      %p50 = scmp.eq.s32.totalorder %s20, 1
      %p51 = por %p49, %p50
      %p52 = scmp.ne.s32.totalorder %s44, %s47
      %p53 = scmp.eq.s32.totalorder %s20, 0
      %p54 = por %p52, %p53
      %p55 = scmp.ne.s32.totalorder %s44, %s47
      %p56 = scmp.eq.s32.totalorder %s25, 1
      %p57 = por %p55, %p56
      %p58 = scmp.ne.s32.totalorder %s47, %s48
      %p59 = scmp.eq.s32.totalorder %s25, 0
      %p60 = por %p58, %p59
      %p61 = scmp.ne.s32.totalorder %s47, %s48
      %p62 = scmp.eq.s32.totalorder %s26, 1
      %p63 = por %p61, %p62
      %p65 = scmp.ne.s32.totalorder %s48, %s64
      %p66 = scmp.eq.s32.totalorder %s26, 0
      %p67 = por %p65, %p66
      %s68 = ssub.s32 %s27, %s39
      %s69 = ssub.s32 %s28, %s35
      %s70 = sor.u32 %s68, %s69
      %p71 = scmp.eq.s32.totalorder %s70, 0
      %s73 = sadd.s32 %s72, 1
      %s74 = scalar_select %p71, %s72, %s73
      %p77 = pneg %p71
      %p78 = scmp.eq.s32.totalorder %s20, 1
      %p79 = por %p77, %p78
      %p80 = scmp.ne.s32.totalorder %s72, %s75
      %p81 = scmp.eq.s32.totalorder %s20, 0
      %p82 = por %p80, %p81
      %p83 = scmp.ne.s32.totalorder %s72, %s75
      %p84 = scmp.eq.s32.totalorder %s25, 1
      %p85 = por %p83, %p84
      %p86 = scmp.ne.s32.totalorder %s75, %s76
      %p87 = scmp.eq.s32.totalorder %s25, 0
      %p88 = por %p86, %p87
      %p89 = scmp.ne.s32.totalorder %s75, %s76
      %p90 = scmp.eq.s32.totalorder %s26, 1
      %p91 = por %p89, %p90
      %p93 = scmp.ne.s32.totalorder %s76, %s92
      %p94 = scmp.eq.s32.totalorder %s26, 0
      %p95 = por %p93, %p94
      %s97 = sadd.s32 %s96, 1
      %p100 = scmp.eq.s32.totalorder %s20, 1
      %p101 = scmp.ne.s32.totalorder %s96, %s98
      %p102 = scmp.eq.s32.totalorder %s20, 0
      %p103 = por %p101, %p102
      %p104 = scmp.ne.s32.totalorder %s96, %s98
      %p105 = scmp.eq.s32.totalorder %s25, 1
      %p106 = por %p104, %p105
      %p107 = scmp.ne.s32.totalorder %s98, %s99
      %p108 = scmp.eq.s32.totalorder %s25, 0
      %p109 = por %p107, %p108
      %p110 = scmp.ne.s32.totalorder %s98, %s99
      %p111 = scmp.eq.s32.totalorder %s26, 1
      %p112 = por %p110, %p111
      %p114 = scmp.ne.s32.totalorder %s99, %s113
      %p115 = scmp.eq.s32.totalorder %s26, 0
      %p116 = por %p114, %p115
      %s118 = sadd.s32 %s117, 1
      %p121 = scmp.eq.s32.totalorder %s20, 1
      %p122 = scmp.ne.s32.totalorder %s117, %s119
      %p123 = scmp.eq.s32.totalorder %s20, 0
      %p124 = por %p122, %p123
      %p125 = scmp.ne.s32.totalorder %s117, %s119
      %p126 = scmp.eq.s32.totalorder %s25, 1
      %p127 = por %p125, %p126
      %p128 = scmp.ne.s32.totalorder %s119, %s120
      %p129 = scmp.eq.s32.totalorder %s25, 0
      %p130 = por %p128, %p129
      %p131 = scmp.ne.s32.totalorder %s119, %s120
      %p132 = scmp.eq.s32.totalorder %s26, 1
      %p133 = por %p131, %p132
      %p135 = scmp.ne.s32.totalorder %s120, %s134
      %p136 = scmp.eq.s32.totalorder %s26, 0
      %p137 = por %p135, %p136
      %s139 = sadd.s32 %s138, 1
      %p142 = scmp.eq.s32.totalorder %s20, 1
      %p143 = scmp.ne.s32.totalorder %s138, %s140
      %p144 = scmp.eq.s32.totalorder %s20, 0
      %p145 = por %p143, %p144
      %p146 = scmp.ne.s32.totalorder %s138, %s140
      %p147 = scmp.eq.s32.totalorder %s25, 1
      %p148 = por %p146, %p147
      %p149 = scmp.ne.s32.totalorder %s140, %s141
      %p150 = scmp.eq.s32.totalorder %s25, 0
      %p151 = por %p149, %p150
      %p152 = scmp.ne.s32.totalorder %s140, %s141
      %p153 = scmp.eq.s32.totalorder %s26, 1
      %p154 = por %p152, %p153
      %p156 = scmp.ne.s32.totalorder %s141, %s155
      %p157 = scmp.eq.s32.totalorder %s26, 0
      %p158 = por %p156, %p157
      %s160 = sadd.s32 %s159, 1
      %p163 = scmp.eq.s32.totalorder %s20, 1
      %p164 = scmp.ne.s32.totalorder %s159, %s161
      %p165 = scmp.eq.s32.totalorder %s20, 0
      %p166 = por %p164, %p165
      %p167 = scmp.ne.s32.totalorder %s159, %s161
      %p168 = scmp.eq.s32.totalorder %s25, 1
      %p169 = por %p167, %p168
      %p170 = scmp.ne.s32.totalorder %s161, %s162
      %p171 = scmp.eq.s32.totalorder %s25, 0
      %p172 = por %p170, %p171
      %p173 = scmp.ne.s32.totalorder %s161, %s162
      %p174 = scmp.eq.s32.totalorder %s26, 1
      %p175 = por %p173, %p174
      %p177 = scmp.ne.s32.totalorder %s162, %s176
      %p178 = scmp.eq.s32.totalorder %s26, 0
      %p179 = por %p177, %p178
      %s181 = sadd.s32 %s180, 1
      %p184 = scmp.eq.s32.totalorder %s20, 1
      %p185 = scmp.ne.s32.totalorder %s180, %s182
      %p186 = scmp.eq.s32.totalorder %s20, 0
      %p187 = por %p185, %p186
      %p188 = scmp.ne.s32.totalorder %s180, %s182
      %p189 = scmp.eq.s32.totalorder %s25, 1
      %p190 = por %p188, %p189
      %p191 = scmp.ne.s32.totalorder %s182, %s183
      %p192 = scmp.eq.s32.totalorder %s25, 0
      %p193 = por %p191, %p192
      %p194 = scmp.ne.s32.totalorder %s182, %s183
      %p195 = scmp.eq.s32.totalorder %s26, 1
      %p196 = por %p194, %p195
      %p198 = scmp.ne.s32.totalorder %s183, %s197
      %p199 = scmp.eq.s32.totalorder %s26, 0
      %p200 = por %p198, %p199
      %s202 = sadd.s32 %s201, 1
      %p205 = scmp.eq.s32.totalorder %s20, 1
      %p206 = scmp.ne.s32.totalorder %s201, %s203
      %p207 = scmp.eq.s32.totalorder %s20, 0
      %p208 = por %p206, %p207
      %p209 = scmp.ne.s32.totalorder %s201, %s203
      %p210 = scmp.eq.s32.totalorder %s25, 1
      %p211 = por %p209, %p210
      %p212 = scmp.ne.s32.totalorder %s203, %s204
      %p213 = scmp.eq.s32.totalorder %s25, 0
      %p214 = por %p212, %p213
      %p215 = scmp.ne.s32.totalorder %s203, %s204
      %p216 = scmp.eq.s32.totalorder %s26, 1
      %p217 = por %p215, %p216
      %p219 = scmp.ne.s32.totalorder %s204, %s218
      %p220 = scmp.eq.s32.totalorder %s26, 0
      %p221 = por %p219, %p220
      %s223 = sadd.s32 %s222, 1
      %p226 = scmp.eq.s32.totalorder %s20, 1
      %p227 = scmp.ne.s32.totalorder %s222, %s224
      %p228 = scmp.eq.s32.totalorder %s20, 0
      %p229 = por %p227, %p228
      %p230 = scmp.ne.s32.totalorder %s222, %s224
      %p231 = scmp.eq.s32.totalorder %s25, 1
      %p232 = por %p230, %p231
      %p233 = scmp.ne.s32.totalorder %s224, %s225
      %p234 = scmp.eq.s32.totalorder %s25, 0
      %p235 = por %p233, %p234
      %p236 = scmp.ne.s32.totalorder %s224, %s225
      %p237 = scmp.eq.s32.totalorder %s26, 1
      %p238 = por %p236, %p237
      %p240 = scmp.ne.s32.totalorder %s225, %s239
      %p241 = scmp.eq.s32.totalorder %s26, 0
      %p242 = por %p240, %p241
      %s244 = sadd.s32 %s243, 1
      %p247 = scmp.eq.s32.totalorder %s20, 1
      %p248 = scmp.ne.s32.totalorder %s243, %s245
      %p249 = scmp.eq.s32.totalorder %s20, 0
      %p250 = por %p248, %p249
      %p251 = scmp.ne.s32.totalorder %s243, %s245
      %p252 = scmp.eq.s32.totalorder %s25, 1
      %p253 = por %p251, %p252
      %p254 = scmp.ne.s32.totalorder %s245, %s246
      %p255 = scmp.eq.s32.totalorder %s25, 0
      %p256 = por %p254, %p255
      %p257 = scmp.ne.s32.totalorder %s245, %s246
      %p258 = scmp.eq.s32.totalorder %s26, 1
      %p259 = por %p257, %p258
      %p261 = scmp.ne.s32.totalorder %s246, %s260
      %p262 = scmp.eq.s32.totalorder %s26, 0
      %p263 = por %p261, %p262
      %s265 = sadd.s32 %s264, 1
      %p268 = scmp.eq.s32.totalorder %s20, 1
      %p269 = scmp.ne.s32.totalorder %s264, %s266
      %p270 = scmp.eq.s32.totalorder %s20, 0
      %p271 = por %p269, %p270
      %p272 = scmp.ne.s32.totalorder %s264, %s266
      %p273 = scmp.eq.s32.totalorder %s25, 1
      %p274 = por %p272, %p273
      %p275 = scmp.ne.s32.totalorder %s266, %s267
      %p276 = scmp.eq.s32.totalorder %s25, 0
      %p277 = por %p275, %p276
      %p278 = scmp.ne.s32.totalorder %s266, %s267
      %p279 = scmp.eq.s32.totalorder %s26, 1
      %p280 = por %p278, %p279
      %p282 = scmp.ne.s32.totalorder %s267, %s281
      %p283 = scmp.eq.s32.totalorder %s26, 0
      %p284 = por %p282, %p283
      %s285 = ssub.s32 %s27, %s39
      %s286 = ssub.s32 %s28, %s35
      %s287 = sor.u32 %s285, %s286
      %p288 = scmp.eq.s32.totalorder %s287, 0
      %s290 = sadd.s32 %s289, 1
      %s291 = scalar_select %p288, %s289, %s290
      %p294 = pneg %p288
      %p295 = scmp.eq.s32.totalorder %s20, 1
      %p296 = por %p294, %p295
      %p297 = scmp.ne.s32.totalorder %s289, %s292
      %p298 = scmp.eq.s32.totalorder %s20, 0
      %p299 = por %p297, %p298
      %p300 = scmp.ne.s32.totalorder %s289, %s292
      %p301 = scmp.eq.s32.totalorder %s25, 1
      %p302 = por %p300, %p301
      %p303 = scmp.ne.s32.totalorder %s292, %s293
      %p304 = scmp.eq.s32.totalorder %s25, 0
      %p305 = por %p303, %p304
      %p306 = scmp.ne.s32.totalorder %s292, %s293
      %p307 = scmp.eq.s32.totalorder %s26, 1
      %p308 = por %p306, %p307
      %p310 = scmp.ne.s32.totalorder %s293, %s309
      %p311 = scmp.eq.s32.totalorder %s26, 0
      %p312 = por %p310, %p311
      %p313 = scmp.le.s32.totalorder 1, %s20
      %p314 = scmp.lt.s32.totalorder %s20, 3
      %p315 = pnand %p313, %p314
      %p316 = pneg %p315
      // Predicated region
      $region9: #{tpu_custom_call.1} parent=5 // pred_check
        _
      $region10: #{tpu_custom_call.1} parent=5 // pred_check_branch
        %318 = sbr.rel (%p315) target = $region12
      $region11: #{tpu_custom_call.1} parent=5 // pred_region
        %s319 = ssub.s32 %s20, 1
        // Predicated region
        $region13: #{tpu_custom_call.1} parent=11 // pred_check
          %p320 = pneg %p109
        $region14: #{tpu_custom_call.1} parent=11 // pred_check_branch
          %322 = sbr.rel (%p320) target = $region16
        $region15: #{tpu_custom_call.1} parent=11 // pred_region
          _
        $region16: #{tpu_custom_call.1} parent=11 // pred_fallthru
          _
        // Predicated region
        $region17: #{tpu_custom_call.1} parent=11 // pred_check
          %p323 = pneg %p130
        $region18: #{tpu_custom_call.1} parent=11 // pred_check_branch
          %325 = sbr.rel (%p323) target = $region20
        $region19: #{tpu_custom_call.1} parent=11 // pred_region
          _
        $region20: #{tpu_custom_call.1} parent=11 // pred_fallthru
          _
        // Predicated region
        $region21: #{tpu_custom_call.1} parent=11 // pred_check
          %p326 = pneg %p151
        $region22: #{tpu_custom_call.1} parent=11 // pred_check_branch
          %328 = sbr.rel (%p326) target = $region24
        $region23: #{tpu_custom_call.1} parent=11 // pred_region
          _
        $region24: #{tpu_custom_call.1} parent=11 // pred_fallthru
          _
        // Predicated region
        $region25: #{tpu_custom_call.1} parent=11 // pred_check
          %p329 = pneg %p172
        $region26: #{tpu_custom_call.1} parent=11 // pred_check_branch
          %331 = sbr.rel (%p329) target = $region28
        $region27: #{tpu_custom_call.1} parent=11 // pred_region
          _
        $region28: #{tpu_custom_call.1} parent=11 // pred_fallthru
          _
        // Predicated region
        $region29: #{tpu_custom_call.1} parent=11 // pred_check
          %p332 = pneg %p193
        $region30: #{tpu_custom_call.1} parent=11 // pred_check_branch
          %334 = sbr.rel (%p332) target = $region32
        $region31: #{tpu_custom_call.1} parent=11 // pred_region
          _
        $region32: #{tpu_custom_call.1} parent=11 // pred_fallthru
          _
        // Predicated region
        $region33: #{tpu_custom_call.1} parent=11 // pred_check
          %p335 = pneg %p214
        $region34: #{tpu_custom_call.1} parent=11 // pred_check_branch
          %337 = sbr.rel (%p335) target = $region36
        $region35: #{tpu_custom_call.1} parent=11 // pred_region
          _
        $region36: #{tpu_custom_call.1} parent=11 // pred_fallthru
          _
        // Predicated region
        $region37: #{tpu_custom_call.1} parent=11 // pred_check
          %p338 = pneg %p235
        $region38: #{tpu_custom_call.1} parent=11 // pred_check_branch
          %340 = sbr.rel (%p338) target = $region40
        $region39: #{tpu_custom_call.1} parent=11 // pred_region
          _
        $region40: #{tpu_custom_call.1} parent=11 // pred_fallthru
          _
        // Predicated region
        $region41: #{tpu_custom_call.1} parent=11 // pred_check
          %p341 = pneg %p256
        $region42: #{tpu_custom_call.1} parent=11 // pred_check_branch
          %343 = sbr.rel (%p341) target = $region44
        $region43: #{tpu_custom_call.1} parent=11 // pred_region
          _
        $region44: #{tpu_custom_call.1} parent=11 // pred_fallthru
          _
        // Predicated region
        $region45: #{tpu_custom_call.1} parent=11 // pred_check
          %p344 = pneg %p277
        $region46: #{tpu_custom_call.1} parent=11 // pred_check_branch
          %346 = sbr.rel (%p344) target = $region48
        $region47: #{tpu_custom_call.1} parent=11 // pred_region
          _
        $region48: #{tpu_custom_call.1} parent=11 // pred_fallthru
          _
      $region12: #{tpu_custom_call.1} parent=5 // pred_fallthru
        _
      %p347 = scmp.lt.s32.totalorder %s20, 2
      // Predicated region
      $region49: #{tpu_custom_call.1} parent=5 // pred_check
        %p348 = pneg %p347
      $region50: #{tpu_custom_call.1} parent=5 // pred_check_branch
        %350 = sbr.rel (%p348) target = $region52
      $region51: #{tpu_custom_call.1} parent=5 // pred_region
        // Predicated region
        $region53: #{tpu_custom_call.1} parent=51 // pred_check
          %p351 = pneg %p54
        $region54: #{tpu_custom_call.1} parent=51 // pred_check_branch
          %353 = sbr.rel (%p351) target = $region56
        $region55: #{tpu_custom_call.1} parent=51 // pred_region
          %p354 = scmp.lt.s32.totalorder %s27, 1
          %s355 = scalar_select %p354, %s27, 1
          %p356 = scmp.lt.s32.totalorder %s28, 0
          %s357 = scalar_select %p356, %s28, 0
          %s358 = sadd.s32 %s357, %s355
          %s359 = smul.addr %s358, 4
          %s360 = scalar_lea.vmem %s0, %s359
        $region56: #{tpu_custom_call.1} parent=51 // pred_fallthru
          _
        // Predicated region
        $region57: #{tpu_custom_call.1} parent=51 // pred_check
          %p361 = pneg %p82
        $region58: #{tpu_custom_call.1} parent=51 // pred_check_branch
          %363 = sbr.rel (%p361) target = $region60
        $region59: #{tpu_custom_call.1} parent=51 // pred_region
          %p364 = scmp.lt.s32.totalorder %s27, 1
          %s365 = scalar_select %p364, %s27, 1
          %p366 = scmp.lt.s32.totalorder %s28, 0
          %s367 = scalar_select %p366, %s28, 0
          %s368 = sadd.s32 %s367, %s365
          %s369 = smul.addr %s368, 4
          %s370 = scalar_lea.vmem %s1, %s369
        $region60: #{tpu_custom_call.1} parent=51 // pred_fallthru
          _
      $region52: #{tpu_custom_call.1} parent=5 // pred_fallthru
        _
      %p371 = scmp.le.s32.totalorder 1, %s20
      %p372 = scmp.lt.s32.totalorder %s20, 3
      %p373 = pnand %p371, %p372
      %p374 = pneg %p373
      // Predicated region
      $region61: #{tpu_custom_call.1} parent=5 // pred_check
        _
      $region62: #{tpu_custom_call.1} parent=5 // pred_check_branch
        %376 = sbr.rel (%p373) target = $region64
      $region63: #{tpu_custom_call.1} parent=5 // pred_region
        %s377 = ssub.s32 %s20, 1
        %p378 = scmp.lt.s32.totalorder %s29, 1
        %s379 = scalar_select %p378, %s29, 1
        %p380 = scmp.lt.s32.totalorder %s30, 0
        %s381 = scalar_select %p380, %s30, 0
        %s382 = sadd.s32 %s381, %s379
        %s383 = smul.addr %s382, 4
        %s384 = scalar_lea.vmem %s0, %s383
        %p385 = pneg %p60
        %p386 = pneg %p57
        %p387 = scmp.lt.s32.totalorder %s29, 1
        %s388 = scalar_select %p387, %s29, 1
        %p389 = scmp.lt.s32.totalorder %s30, 0
        %s390 = scalar_select %p389, %s30, 0
        %s391 = sadd.s32 %s390, %s388
        %s392 = smul.addr %s391, 4
        %s393 = scalar_lea.vmem %s1, %s392
        %p394 = pneg %p88
        %p395 = pneg %p85
        %p396 = pneg %p109
        %p397 = pneg %p106
        %p398 = pneg %p130
        %p399 = pneg %p127
        %p400 = pneg %p151
        %p401 = pneg %p148
        %p402 = pneg %p172
        %p403 = pneg %p169
        %p404 = pneg %p193
        %p405 = pneg %p190
        %p406 = pneg %p214
        %p407 = pneg %p211
        %p408 = pneg %p235
        %p409 = pneg %p232
        %p410 = pneg %p256
        %p411 = pneg %p253
        %p412 = pneg %p277
        %p413 = pneg %p274
        %p414 = pneg %p305
        %p415 = pneg %p302
        %s416 = sand.u32 %s292, 1
        %s417 = scalar_lea.sflag [#allocation3], %s416
        %s418 = sand.u32 %s292, 1
        %s419 = smul.addr %s418, 8
        %s420 = scalar_lea.vmem [#allocation2], %s419
        %p421 = scmp.lt.s32.totalorder %s29, 1
        %s422 = scalar_select %p421, %s29, 1
        %p423 = scmp.lt.s32.totalorder %s30, 0
        %s424 = scalar_select %p423, %s30, 0
        %s425 = sadd.s32 %s424, %s422
        %s426 = smul.addr %s425, 4
        %s427 = scalar_lea.vmem %s0, %s426
        %p428 = scmp.lt.s32.totalorder %s29, 1
        %s429 = scalar_select %p428, %s29, 1
        %p430 = scmp.lt.s32.totalorder %s30, 0
        %s431 = scalar_select %p430, %s30, 0
        %s432 = sadd.s32 %s431, %s429
        %s433 = smul.addr %s432, 4
        %s434 = scalar_lea.vmem %s1, %s433
        %v435 = vld [vmem:[%s427] sm:$0xf]
        %v436 = vld [vmem:[%s434] sm:$0xf]
        %438 = vrot.lane.b32.xlu0 %v435, 2
        %v439 = vpop.permute.xlu0 %438
        %442 = vrot.lane.b32.xlu0 %v436, 16
        %v443 = vpop.permute.xlu0 %442
        %vm445 = vcmask 15360
        %v446 = vsel %vm445, %v436, %v439
        %vm447 = vcmask 146432
        %v448 = vsel %vm447, %v446, %v443
        %s449 = smul.u32 %s30, 16
        %s450 = ssub.s32 %s449, 2
        %v451 = vlaneseq
        %v452 = vand.u32 %v451, 127
        %v453 = vstv %s450
        %v454 = vadd.s32 %v453, %v452
        %vm455 = vcmp.ge.s32.totalorder %v454, 0
        %vm456 = vcmp.lt.s32.totalorder %v454, 16
        %vm457 = vmand %vm455, %vm456
        %v458 = vld [vmem:[%s3] sm:$0xf]
        %v459 = vld [vmem:[%s4] sm:$0xf]
        %vm460 = vcmask 158720
        %v461 = vsel %vm460, %v448, 0.0
        %v462 = vrot.slane %v461, 4
        %v463 = vadd.f32 %v461, %v462
        %v464 = vrot.slane %v463, 2
        %v465 = vadd.f32 %v463, %v464
        %v466 = vrot.slane %v465, 1
        %v467 = vadd.f32 %v465, %v466
        %v468 = vrcp.pop 4.0
        %v469 = vmul.f32 %v467, %v468
        %v470 = vsub.f32 %v448, %v469
        %v471 = vmul.f32 %v470, %v470
        %v472 = vsel %vm460, %v471, 0.0
        %v473 = vrot.slane %v472, 4
        %v474 = vadd.f32 %v472, %v473
        %v475 = vrot.slane %v474, 2
        %v476 = vadd.f32 %v474, %v475
        %v477 = vrot.slane %v476, 1
        %v478 = vadd.f32 %v476, %v477
        %v479 = vmul.f32 %v478, %v468
        %v480 = vadd.f32 %v479, 1e-05
        %v481 = vrsqrt.pop %v480
        %v482 = vmul.f32 %v470, %v481
        %484 = vset.pattern.permute.xlu0 0
        %485 = vperm.xlu0 %484, %v458
        %v486 = vpop.permute.xlu0 %485
        %v488 = vmul.f32 %v482, %v486
        %490 = vset.pattern.permute.xlu0 0
        %491 = vperm.xlu0 %490, %v459
        %v492 = vpop.permute.xlu0 %491
        %v494 = vadd.f32 %v488, %v492
        %v495 = vmax.f32 %v494, 0.0
        %v496 = vsel %vm457, 1, 0
        %vm497 = vcmp.eq.s32.totalorder %v496, 1
        %v498 = vsel %vm497, %v495, 0.0
        %v500 = vrot.slane %v498, 4
        %501 = vrot.lane.b32.xlu0 %v500, 127
        %v502 = vpop.permute.xlu0 %501
        %504 = vrot.lane.b32.xlu0 %v498, 126
        %v505 = vpop.permute.xlu0 %504
        %vm506 = vcmask 1043456
        %v507 = vsel %vm506, %v498, %v502
        %v508 = vld [vmem:[%s5] sm:$0xff]
        %v509 = vld [vmem:[%s6] sm:$0xff]
        %511 = vset.pattern.permute.xlu0 0
        %512 = vperm.xlu0 %511, %v509
        %v513 = vpop.permute.xlu0 %512
        %vm515 = vcmask 97280
        %v517 = vsel %vm515, %v508, 0
        %v519 = vsel %vm506, %v505, 0
        %521 = vmatprep.subr.mxu0 0.0
        %522 = vmatpush1.msra.mxu0 %v507
        %523 = vmatprep.subr.mxu0 0.0
        %524 = vmatpush1.msra.mxu0 %v519
        %525 = vmatprep.subr.mxu0 0.0
        %526 = vmatpush1.msra.mxu0 0.0
        %527 = vmatprep.subr.mxu0 0.0
        %528 = vmatpush1.msra.mxu0 0.0
        %529 = vmatprep.subr.mxu0 0.0
        %530 = vmatpush1.msra.mxu0 0.0
        %531 = vmatprep.subr.mxu0 0.0
        %532 = vmatpush1.msra.mxu0 0.0
        %533 = vmatprep.subr.mxu0 0.0
        %534 = vmatpush1.msra.mxu0 0.0
        %535 = vmatprep.subr.mxu0 0.0
        %536 = vmatpush1.msra.mxu0 0.0
        %537 = vmatprep.subr.mxu0 0.0
        %538 = vmatpush1.msra.mxu0 0.0
        %539 = vmatprep.subr.mxu0 0.0
        %540 = vmatpush1.msra.mxu0 0.0
        %541 = vmatprep.subr.mxu0 0.0
        %542 = vmatpush1.msra.mxu0 0.0
        %543 = vmatprep.subr.mxu0 0.0
        %544 = vmatpush1.msra.mxu0 0.0
        %545 = vmatprep.subr.mxu0 0.0
        %546 = vmatpush1.msra.mxu0 0.0
        %547 = vmatprep.subr.mxu0 0.0
        %548 = vmatpush1.msra.mxu0 0.0
        %549 = vmatprep.subr.mxu0 0.0
        %550 = vmatpush1.msra.mxu0 0.0
        %551 = vmatprep.subr.mxu0 0.0
        %552 = vmatpush1.msra.mxu0 0.0
        %553 = vmatprep.subr.mxu0 0.0
        %554 = vmatpush1.msra.mxu0 0.0
        %555 = vmatprep.subr.mxu0 0.0
        %556 = vmatpush1.msra.mxu0 0.0
        %557 = vmatprep.subr.mxu0 0.0
        %558 = vmatpush1.msra.mxu0 0.0
        %559 = vmatprep.subr.mxu0 0.0
        %560 = vmatpush1.msra.mxu0 0.0
        %561 = vmatprep.subr.mxu0 0.0
        %562 = vmatpush1.msra.mxu0 0.0
        %563 = vmatprep.subr.mxu0 0.0
        %564 = vmatpush1.msra.mxu0 0.0
        %565 = vmatprep.subr.mxu0 0.0
        %566 = vmatpush1.msra.mxu0 0.0
        %567 = vmatprep.subr.mxu0 0.0
        %568 = vmatpush1.msra.mxu0 0.0
        %569 = vmatprep.subr.mxu0 0.0
        %570 = vmatpush1.msra.mxu0 0.0
        %571 = vmatprep.subr.mxu0 0.0
        %572 = vmatpush1.msra.mxu0 0.0
        %573 = vmatprep.subr.mxu0 0.0
        %574 = vmatpush1.msra.mxu0 0.0
        %575 = vmatprep.subr.mxu0 0.0
        %576 = vmatpush1.msra.mxu0 0.0
        %577 = vmatprep.subr.mxu0 0.0
        %578 = vmatpush1.msra.mxu0 0.0
        %579 = vmatprep.subr.mxu0 0.0
        %580 = vmatpush1.msra.mxu0 0.0
        %581 = vmatprep.subr.mxu0 0.0
        %582 = vmatpush1.msra.mxu0 0.0
        %583 = vmatprep.subr.mxu0 0.0
        %584 = vmatpush1.msra.mxu0 0.0
        %585 = vmatprep.mubr.f32.mxu0 0.0
        %586 = vmatmul.mubr.f32.gmra.mrb[0].mxu0 %v517
        %v587 = vpop.f32.mrb[0].mxu0
        %v588 = vadd.f32 %v513, %v587
        %v589 = vpop.f32.mrb[0].mxu0
        %590 = vdwg.mxu0
        %v591 = vld [vmem:[%s7] sm:$0xff]
        %v592 = vld [vmem:[%s8] sm:$0xff]
        %v593 = vsel %vm447, %v588, 0.0
        %v594 = vrot.slane %v593, 4
        %v595 = vadd.f32 %v593, %v594
        %v596 = vrot.slane %v595, 2
        %v597 = vadd.f32 %v595, %v596
        %v598 = vrot.slane %v597, 1
        %v599 = vadd.f32 %v597, %v598
        %v600 = vrcp.pop 8.0
        %v601 = vmul.f32 %v599, %v600
        %v602 = vsub.f32 %v588, %v601
        %v603 = vmul.f32 %v602, %v602
        %v604 = vsel %vm447, %v603, 0.0
        %v605 = vrot.slane %v604, 4
        %v606 = vadd.f32 %v604, %v605
        %v607 = vrot.slane %v606, 2
        %v608 = vadd.f32 %v606, %v607
        %v609 = vrot.slane %v608, 1
        %v610 = vadd.f32 %v608, %v609
        %v611 = vmul.f32 %v610, %v600
        %v612 = vadd.f32 %v611, 1e-05
        %v613 = vrsqrt.pop %v612
        %v614 = vmul.f32 %v602, %v613
        %616 = vset.pattern.permute.xlu0 0
        %617 = vperm.xlu0 %616, %v591
        %v618 = vpop.permute.xlu0 %617
        %v620 = vmul.f32 %v614, %v618
        %622 = vset.pattern.permute.xlu0 0
        %623 = vperm.xlu0 %622, %v592
        %v624 = vpop.permute.xlu0 %623
        %v626 = vadd.f32 %v620, %v624
        %v627 = vmax.f32 %v626, 0.0
        %s628 = ssub.s32 %s449, 1
        %v629 = vstv %s628
        %v630 = vadd.s32 %v629, %v452
        %vm631 = vcmp.ge.s32.totalorder %v630, 0
        %vm632 = vcmp.lt.s32.totalorder %v630, 16
        %vm633 = vmand %vm631, %vm632
        %v634 = vsel %vm633, 1, 0
        %vm635 = vcmp.eq.s32.totalorder %v634, 1
        %v636 = vsel %vm635, %v627, 0.0
        %638 = vrot.lane.b32.xlu0 %v636, 127
        %v639 = vpop.permute.xlu0 %638
        %641 = vrot.lane.b32.xlu0 %v636, 126
        %v642 = vpop.permute.xlu0 %641
        %v644 = vld [vmem:[%s2] sm:$0xff]
        %v645 = vld [vmem:[%s9] sm:$0xff]
        %v646 = vld [vmem:[%s10] sm:$0xff]
        %648 = vset.pattern.permute.xlu0 0
        %649 = vperm.xlu0 %648, %v646
        %v650 = vpop.permute.xlu0 %649
        %vm652 = vcmask 31744
        %v654 = vsel %vm652, %v644, 0
        %v656 = vsel %vm506, %v435, 0
        %658 = vmatprep.subr.mxu0 0.0
        %659 = vmatpush1.msra.mxu0 %v656
        %660 = vmatprep.subr.mxu0 0.0
        %661 = vmatpush1.msra.mxu0 0.0
        %662 = vmatprep.subr.mxu0 0.0
        %663 = vmatpush1.msra.mxu0 0.0
        %664 = vmatprep.subr.mxu0 0.0
        %665 = vmatpush1.msra.mxu0 0.0
        %666 = vmatprep.subr.mxu0 0.0
        %667 = vmatpush1.msra.mxu0 0.0
        %668 = vmatprep.subr.mxu0 0.0
        %669 = vmatpush1.msra.mxu0 0.0
        %670 = vmatprep.subr.mxu0 0.0
        %671 = vmatpush1.msra.mxu0 0.0
        %672 = vmatprep.subr.mxu0 0.0
        %673 = vmatpush1.msra.mxu0 0.0
        %674 = vmatprep.subr.mxu0 0.0
        %675 = vmatpush1.msra.mxu0 0.0
        %676 = vmatprep.subr.mxu0 0.0
        %677 = vmatpush1.msra.mxu0 0.0
        %678 = vmatprep.subr.mxu0 0.0
        %679 = vmatpush1.msra.mxu0 0.0
        %680 = vmatprep.subr.mxu0 0.0
        %681 = vmatpush1.msra.mxu0 0.0
        %682 = vmatprep.subr.mxu0 0.0
        %683 = vmatpush1.msra.mxu0 0.0
        %684 = vmatprep.subr.mxu0 0.0
        %685 = vmatpush1.msra.mxu0 0.0
        %686 = vmatprep.subr.mxu0 0.0
        %687 = vmatpush1.msra.mxu0 0.0
        %688 = vmatprep.subr.mxu0 0.0
        %689 = vmatpush1.msra.mxu0 0.0
        %690 = vmatprep.subr.mxu0 0.0
        %691 = vmatpush1.msra.mxu0 0.0
        %692 = vmatprep.subr.mxu0 0.0
        %693 = vmatpush1.msra.mxu0 0.0
        %694 = vmatprep.subr.mxu0 0.0
        %695 = vmatpush1.msra.mxu0 0.0
        %696 = vmatprep.subr.mxu0 0.0
        %697 = vmatpush1.msra.mxu0 0.0
        %698 = vmatprep.subr.mxu0 0.0
        %699 = vmatpush1.msra.mxu0 0.0
        %700 = vmatprep.subr.mxu0 0.0
        %701 = vmatpush1.msra.mxu0 0.0
        %702 = vmatprep.subr.mxu0 0.0
        %703 = vmatpush1.msra.mxu0 0.0
        %704 = vmatprep.subr.mxu0 0.0
        %705 = vmatpush1.msra.mxu0 0.0
        %706 = vmatprep.subr.mxu0 0.0
        %707 = vmatpush1.msra.mxu0 0.0
        %708 = vmatprep.subr.mxu0 0.0
        %709 = vmatpush1.msra.mxu0 0.0
        %710 = vmatprep.subr.mxu0 0.0
        %711 = vmatpush1.msra.mxu0 0.0
        %712 = vmatprep.subr.mxu0 0.0
        %713 = vmatpush1.msra.mxu0 0.0
        %714 = vmatprep.subr.mxu0 0.0
        %715 = vmatpush1.msra.mxu0 0.0
        %716 = vmatprep.subr.mxu0 0.0
        %717 = vmatpush1.msra.mxu0 0.0
        %718 = vmatprep.subr.mxu0 0.0
        %719 = vmatpush1.msra.mxu0 0.0
        %720 = vmatprep.subr.mxu0 0.0
        %721 = vmatpush1.msra.mxu0 0.0
        %722 = vmatprep.mubr.f32.mxu0 0.0
        %723 = vmatmul.mubr.f32.gmra.mrb[0].mxu0 %v654
        %v724 = vpop.f32.mrb[0].mxu0
        %v725 = vadd.f32 %v650, %v724
        %v726 = vpop.f32.mrb[0].mxu0
        %727 = vdwg.mxu0
        %vm728 = vcmask 195584
        %v730 = vsel %vm728, %v645, 0
        %732 = vmatprep.subr.mxu0 0.0
        %733 = vmatpush1.msra.mxu0 %v636
        %734 = vmatprep.subr.mxu0 0.0
        %735 = vmatpush1.msra.mxu0 %v639
        %736 = vmatprep.subr.mxu0 0.0
        %737 = vmatpush1.msra.mxu0 %v642
        %738 = vmatprep.subr.mxu0 0.0
        %739 = vmatpush1.msra.mxu0 0.0
        %740 = vmatprep.subr.mxu0 0.0
        %741 = vmatpush1.msra.mxu0 0.0
        %742 = vmatprep.subr.mxu0 0.0
        %743 = vmatpush1.msra.mxu0 0.0
        %744 = vmatprep.subr.mxu0 0.0
        %745 = vmatpush1.msra.mxu0 0.0
        %746 = vmatprep.subr.mxu0 0.0
        %747 = vmatpush1.msra.mxu0 0.0
        %748 = vmatprep.subr.mxu0 0.0
        %749 = vmatpush1.msra.mxu0 0.0
        %750 = vmatprep.subr.mxu0 0.0
        %751 = vmatpush1.msra.mxu0 0.0
        %752 = vmatprep.subr.mxu0 0.0
        %753 = vmatpush1.msra.mxu0 0.0
        %754 = vmatprep.subr.mxu0 0.0
        %755 = vmatpush1.msra.mxu0 0.0
        %756 = vmatprep.subr.mxu0 0.0
        %757 = vmatpush1.msra.mxu0 0.0
        %758 = vmatprep.subr.mxu0 0.0
        %759 = vmatpush1.msra.mxu0 0.0
        %760 = vmatprep.subr.mxu0 0.0
        %761 = vmatpush1.msra.mxu0 0.0
        %762 = vmatprep.subr.mxu0 0.0
        %763 = vmatpush1.msra.mxu0 0.0
        %764 = vmatprep.subr.mxu0 0.0
        %765 = vmatpush1.msra.mxu0 0.0
        %766 = vmatprep.subr.mxu0 0.0
        %767 = vmatpush1.msra.mxu0 0.0
        %768 = vmatprep.subr.mxu0 0.0
        %769 = vmatpush1.msra.mxu0 0.0
        %770 = vmatprep.subr.mxu0 0.0
        %771 = vmatpush1.msra.mxu0 0.0
        %772 = vmatprep.subr.mxu0 0.0
        %773 = vmatpush1.msra.mxu0 0.0
        %774 = vmatprep.subr.mxu0 0.0
        %775 = vmatpush1.msra.mxu0 0.0
        %776 = vmatprep.subr.mxu0 0.0
        %777 = vmatpush1.msra.mxu0 0.0
        %778 = vmatprep.subr.mxu0 0.0
        %779 = vmatpush1.msra.mxu0 0.0
        %780 = vmatprep.subr.mxu0 0.0
        %781 = vmatpush1.msra.mxu0 0.0
        %782 = vmatprep.subr.mxu0 0.0
        %783 = vmatpush1.msra.mxu0 0.0
        %784 = vmatprep.subr.mxu0 0.0
        %785 = vmatpush1.msra.mxu0 0.0
        %786 = vmatprep.subr.mxu0 0.0
        %787 = vmatpush1.msra.mxu0 0.0
        %788 = vmatprep.subr.mxu0 0.0
        %789 = vmatpush1.msra.mxu0 0.0
        %790 = vmatprep.subr.mxu0 0.0
        %791 = vmatpush1.msra.mxu0 0.0
        %792 = vmatprep.subr.mxu0 0.0
        %793 = vmatpush1.msra.mxu0 0.0
        %794 = vmatprep.subr.mxu0 0.0
        %795 = vmatpush1.msra.mxu0 0.0
        %796 = vmatprep.mubr.f32.mxu0 0.0
        %797 = vmatmul.mubr.f32.gmra.mrb[0].mxu0 %v730
        %v798 = vpop.f32.mrb[0].mxu0
        %v799 = vadd.f32 %v725, %v798
        %v800 = vpop.f32.mrb[0].mxu0
        %801 = vdwg.mxu0
        %vm802 = vcmask 130048
        %803 = vst.msk [vmem:[%s420] sm:$0xff] %vm802, %v799
        %s804 = sand.u32 %s292, 1
        %s805 = scalar_lea.sflag [#allocation3], %s804
        %s806 = sand.u32 %s292, 1
        %s807 = smul.addr %s806, 8
        %s808 = scalar_lea.vmem [#allocation2], %s807
        // Predicated region
        $region65: #{tpu_custom_call.1} parent=63 // pred_check
          %p809 = pneg %p302
        $region66: #{tpu_custom_call.1} parent=63 // pred_check_branch
          %811 = sbr.rel (%p809) target = $region68
        $region67: #{tpu_custom_call.1} parent=63 // pred_region
          %s813 = ssub.s32 128, 128
          %814 = vsyncadd %s805, %s813
          %s815 = sadd.s32 %s30, %s29
          %s816 = smul.addr %s815, 128
          %s817 = scalar_lea.hbm %s11, %s816
          %s819 = sshll.u32 %s808, 4
          %s820 = int_to_ptr.vmem [resolvable:$true] %s819
          %822 = dma.vmem_to_hbm [thread:$0]  %s820, 128, %s817, %s805
        $region68: #{tpu_custom_call.1} parent=63 // pred_fallthru
          _
      $region64: #{tpu_custom_call.1} parent=5 // pred_fallthru
        _
      %p823 = scmp.le.s32.totalorder 2, %s20
      // Predicated region
      $region69: #{tpu_custom_call.1} parent=5 // pred_check
        %p824 = pneg %p823
      $region70: #{tpu_custom_call.1} parent=5 // pred_check_branch
        %826 = sbr.rel (%p824) target = $region72
      $region71: #{tpu_custom_call.1} parent=5 // pred_region
        %s827 = ssub.s32 %s20, 2
        // Predicated region
        $region73: #{tpu_custom_call.1} parent=71 // pred_check
          %p828 = pneg %p308
        $region74: #{tpu_custom_call.1} parent=71 // pred_check_branch
          %830 = sbr.rel (%p828) target = $region76
        $region75: #{tpu_custom_call.1} parent=71 // pred_region
          %s831 = sand.u32 %s293, 1
          %s832 = scalar_lea.sflag [#allocation3], %s831
          %s833 = sand.u32 %s293, 1
          %s834 = smul.addr %s833, 8
          %s835 = scalar_lea.vmem [#allocation2], %s834
          %836 = dma.done %s832, 128
        $region76: #{tpu_custom_call.1} parent=71 // pred_fallthru
          _
      $region72: #{tpu_custom_call.1} parent=5 // pred_fallthru
        _
    $region6: #{tpu_custom_call.1} parent=1 // loop_footer
      %s24 = sadd.s32 1, %s20
    $region7: #{tpu_custom_call.1} parent=1 // loop_footer_branch
      %19 = sbr.rel target = $region3
    $region8: #{tpu_custom_call.1} parent=1 // loop_exit
      _
    %837 = vsyncpa [#allocation3], 1
    %s838 = scalar_lea.sflag [#allocation3], 1
    %839 = vsyncpa %s838, 1

</llo_original>
